<compile_context>
chip_gen: v7x
topology: tpu7x:2x2x1
jax: 0.10.0
libtpu: 0.0.40
codegen_flags: <defaults>
</compile_context>

<pallas_src>
import functools
import math

import jax
import jax.numpy as jnp
from jax import lax
from jax.experimental import pallas as pl
from jax.experimental.pallas import tpu as pltpu


# ----------------------------------------------------------------------------
# Fused (Conv1d as k GEMMs) + bias + GLU kernel.
# ----------------------------------------------------------------------------
def _conv_glu_kernel(k, *refs):
    """refs layout:
         x_0 .. x_{k-1}   : (tm, C_in)   tap-j strided input slices
         wa_0 .. wa_{k-1} : (C_in, tn)   linear-half weights (per tap)
         wb_0 .. wb_{k-1} : (C_in, tn)   gate-half weights (per tap)
         ba, bb           : (1, tn)      split bias
         out              : (tm, tn)
    Computes out = (sum_j x_j @ wa_j + ba) * sigmoid(sum_j x_j @ wb_j + bb).
    """
    xs = refs[0:k]
    was = refs[k:2 * k]
    wbs = refs[2 * k:3 * k]
    ba = refs[3 * k]
    bb = refs[3 * k + 1]
    out = refs[3 * k + 2]

    a = ba[...].astype(jnp.float32)          # (1, tn) -> broadcasts over rows
    g = bb[...].astype(jnp.float32)
    for j in range(k):
        x = xs[j][...]
        a = a + jnp.dot(x, was[j][...], preferred_element_type=jnp.float32)
        g = g + jnp.dot(x, wbs[j][...], preferred_element_type=jnp.float32)

    out[...] = (a * jax.nn.sigmoid(g)).astype(out.dtype)


def _fused_conv_glu_gemm(x_taps, wa_taps, wb_taps, ba, bb, *,
                         tm_max=256, tn_max=512):
    """GEMM-shaped fused conv+GLU.  x_taps[j]: (M, C_in); wa/wb[j]: (C_in, N);
    ba/bb: (1, N).  Returns (M, N) f32."""
    k = len(x_taps)
    M, c_in = x_taps[0].shape
    N = wa_taps[0].shape[1]

    # Tile sizes: full dim when small (block == array dim is always legal);
    # otherwise multiples of (8, 128) so the (8,128) block constraint holds.
    tm = M if M <= tm_max else tm_max        # tm_max is a multiple of 8
    tn = N if N <= tn_max else tn_max        # tn_max is a multiple of 128
    grid = (pl.cdiv(M, tm), pl.cdiv(N, tn))

    x_specs = [pl.BlockSpec((tm, c_in), lambda i, j: (i, 0)) for _ in range(k)]
    wa_specs = [pl.BlockSpec((c_in, tn), lambda i, j: (0, j)) for _ in range(k)]
    wb_specs = [pl.BlockSpec((c_in, tn), lambda i, j: (0, j)) for _ in range(k)]
    b_specs = [pl.BlockSpec((1, tn), lambda i, j: (0, j)) for _ in range(2)]

    return pl.pallas_call(
        functools.partial(_conv_glu_kernel, k),
        out_shape=jax.ShapeDtypeStruct((M, N), jnp.float32),
        grid_spec=pltpu.PrefetchScalarGridSpec(
            num_scalar_prefetch=0,
            grid=grid,
            in_specs=x_specs + wa_specs + wb_specs + b_specs,
            out_specs=pl.BlockSpec((tm, tn), lambda i, j: (i, j)),
        ),
        compiler_params=pltpu.CompilerParams(
            dimension_semantics=("parallel", "parallel")),
    )(*x_taps, *wa_taps, *wb_taps, ba, bb)


def conv1d_glu_pallas(x, w, b, *, stride=2):
    """One subsampler layer.

    x: (B, T, C_in) channels-last activation.
    w: (2*C_out, C_in, k)  PyTorch Conv1d weight layout.
    b: (2*C_out,)
    Returns (B, T_out, C_out) after GLU over channels.
    """
    B, T, c_in = x.shape
    c_out2, _, k = w.shape
    c_out = c_out2 // 2
    pad = k // 2
    t_out = (T + 2 * pad - k) // stride + 1

    # Zero-pad the temporal axis once in the wrapper (cheap XLA op).
    xp = jnp.pad(x, ((0, 0), (pad, pad), (0, 0)))

    # Tap-j strided slices: x_j[b, t, c] = xp[b, stride*t + j, c], flattened to
    # (B*T_out, C_in) so the GEMM M axis is B*T_out (MXU rows well filled).
    x_taps = [
        lax.slice(
            xp, (0, j, 0),
            (B, j + stride * (t_out - 1) + 1, c_in),
            (1, stride, 1),
        ).reshape(B * t_out, c_in)
        for j in range(k)
    ]

    # Per-tap weights, transposed for x @ W, split into GLU (linear, gate) halves.
    wt = jnp.transpose(w, (2, 1, 0))                  # (k, C_in, 2*C_out)
    wa_taps = [wt[j, :, :c_out] for j in range(k)]
    wb_taps = [wt[j, :, c_out:] for j in range(k)]
    ba = b[:c_out].reshape(1, c_out)
    bb = b[c_out:].reshape(1, c_out)

    out = _fused_conv_glu_gemm(x_taps, wa_taps, wb_taps, ba, bb)
    return out.reshape(B, t_out, c_out)


# ----------------------------------------------------------------------------
# Module wrapper mirroring the PyTorch Conv1dSubsampler.
# ----------------------------------------------------------------------------
class Conv1dSubsamplerPallas:
    def __init__(self, key, in_channels, mid_channels, out_channels,
                 kernel_sizes=(3, 3)):
        self.n_layers = len(kernel_sizes)
        self.kernel_sizes = tuple(kernel_sizes)
        self.params = []
        for i, k in enumerate(kernel_sizes):
            cin = in_channels if i == 0 else mid_channels // 2
            cout = mid_channels if i < self.n_layers - 1 else out_channels * 2
            key, kw, kb = jax.random.split(key, 3)
            bound = 1.0 / math.sqrt(cin * k)
            w = jax.random.uniform(kw, (cout, cin, k), jnp.float32, -bound, bound)
            bias = jax.random.uniform(kb, (cout,), jnp.float32, -bound, bound)
            self.params.append((w, bias))

    def get_out_seq_lens(self, in_lens):
        out = in_lens
        for _ in range(self.n_layers):
            out = jnp.floor((out.astype(jnp.float32) - 1.0) / 2.0 + 1.0)
        return out.astype(jnp.int32)

    def __call__(self, src_tokens, src_lengths):
        # src_tokens: (B, T, C_in).  We keep channels last throughout (same
        # semantics as the PyTorch transpose-to-(B,C,T) formulation).
        x = src_tokens
        for (w, b) in self.params:
            x = conv1d_glu_pallas(x, w, b, stride=2)
        x = jnp.transpose(x, (1, 0, 2))               # (T_out, B, C_out)
        return x, self.get_out_seq_lens(src_lengths)


# ----------------------------------------------------------------------------
# Pure-JAX (XLA conv) reference for correctness checking.
# ----------------------------------------------------------------------------
def conv1d_subsampler_ref(src_tokens, src_lengths, params, n_layers):
    x = jnp.transpose(src_tokens, (0, 2, 1))          # (B, C, T)
    for (w, b) in params:
        k = w.shape[-1]
        pad = k // 2
        x = lax.conv_general_dilated(
            x, w, window_strides=(2,), padding=[(pad, pad)],
            dimension_numbers=("NCH", "OIH", "NCH"),
            precision=lax.Precision.HIGHEST,
        ) + b[None, :, None]
        c = x.shape[1] // 2
        x = x[:, :c] * jax.nn.sigmoid(x[:, c:])        # GLU over channel dim
    x = jnp.transpose(x, (2, 0, 1))                   # (T_out, B, C_out)
    lens = src_lengths
    for _ in range(n_layers):
        lens = jnp.floor((lens.astype(jnp.float32) - 1.0) / 2.0 + 1.0)
    return x, lens.astype(jnp.int32)


if __name__ == "__main__":
    key = jax.random.PRNGKey(0)

    # Small shapes consistent with the module's forward:
    # src_tokens (batch, seq, in_channels); two conv layers with stride 2.
    B, T = 2, 16
    IN_CH, MID_CH, OUT_CH = 16, 32, 32

    key, kx, kp = jax.random.split(key, 3)
    src_tokens = jax.random.normal(kx, (B, T, IN_CH), jnp.float32)
    src_lengths = jnp.array([16, 12], jnp.int32)

    model = Conv1dSubsamplerPallas(kp, IN_CH, MID_CH, OUT_CH, kernel_sizes=(3, 3))

    out, out_lens = model(src_tokens, src_lengths)
    jax.block_until_ready((out, out_lens))

    # Correctness check against the XLA convolution reference.
    ref_out, ref_lens = conv1d_subsampler_ref(
        src_tokens, src_lengths, model.params, model.n_layers)
    assert out.shape == ref_out.shape, (out.shape, ref_out.shape)
    assert jnp.allclose(out, ref_out, rtol=1e-4, atol=1e-4), "mismatch vs reference"
    assert jnp.array_equal(out_lens, ref_lens), "length mismatch vs reference"

    print("KERNEL_OK")
</pallas_src>

<mosaic_0001>
module attributes {stable_mosaic.version = 11 : i64} {
  func.func @_conv_glu_kernel(%arg0: i32, %arg1: i32, %arg2: memref<16x16xf32, #tpu.memory_space<vmem>>, %arg3: memref<16x16xf32, #tpu.memory_space<vmem>>, %arg4: memref<16x16xf32, #tpu.memory_space<vmem>>, %arg5: memref<16x16xf32, #tpu.memory_space<vmem>>, %arg6: memref<16x16xf32, #tpu.memory_space<vmem>>, %arg7: memref<16x16xf32, #tpu.memory_space<vmem>>, %arg8: memref<16x16xf32, #tpu.memory_space<vmem>>, %arg9: memref<16x16xf32, #tpu.memory_space<vmem>>, %arg10: memref<16x16xf32, #tpu.memory_space<vmem>>, %arg11: memref<1x16xf32, #tpu.memory_space<vmem>>, %arg12: memref<1x16xf32, #tpu.memory_space<vmem>>, %arg13: memref<16x16xf32, #tpu.memory_space<vmem>>) attributes {dimension_semantics = [#tpu.dimension_semantics<parallel>, #tpu.dimension_semantics<parallel>], iteration_bounds = array<i64: 1, 1>, scalar_prefetch = 0 : i64, scratch_operands = 0 : i64, tpu.core_type = #tpu.core_type<tc>, window_params = [{transform_indices = @transform_0, window_bounds = array<i64: 16, 16>}, {transform_indices = @transform_1, window_bounds = array<i64: 16, 16>}, {transform_indices = @transform_2, window_bounds = array<i64: 16, 16>}, {transform_indices = @transform_3, window_bounds = array<i64: 16, 16>}, {transform_indices = @transform_4, window_bounds = array<i64: 16, 16>}, {transform_indices = @transform_5, window_bounds = array<i64: 16, 16>}, {transform_indices = @transform_6, window_bounds = array<i64: 16, 16>}, {transform_indices = @transform_7, window_bounds = array<i64: 16, 16>}, {transform_indices = @transform_8, window_bounds = array<i64: 16, 16>}, {transform_indices = @transform_9, window_bounds = array<i64: 1, 16>}, {transform_indices = @transform_10, window_bounds = array<i64: 1, 16>}, {transform_indices = @transform_11, window_bounds = array<i64: 16, 16>}]} {
    %c0 = arith.constant 0 : index
    %c0_0 = arith.constant 0 : index
    %0 = vector.load %arg11[%c0, %c0_0] : memref<1x16xf32, #tpu.memory_space<vmem>>, vector<1x16xf32>
    %c0_1 = arith.constant 0 : index
    %c0_2 = arith.constant 0 : index
    %1 = vector.load %arg12[%c0_1, %c0_2] : memref<1x16xf32, #tpu.memory_space<vmem>>, vector<1x16xf32>
    %c0_3 = arith.constant 0 : index
    %c0_4 = arith.constant 0 : index
    %2 = vector.load %arg2[%c0_3, %c0_4] : memref<16x16xf32, #tpu.memory_space<vmem>>, vector<16x16xf32>
    %c0_5 = arith.constant 0 : index
    %c0_6 = arith.constant 0 : index
    %3 = vector.load %arg5[%c0_5, %c0_6] : memref<16x16xf32, #tpu.memory_space<vmem>>, vector<16x16xf32>
    %cst = arith.constant dense<0.000000e+00> : vector<16x16xf32>
    %4 = tpu.matmul %2, %3, %cst {dimension_numbers = #tpu.dot_dimension_numbers<[1], [0], [0], [1], [0, 0, 1, 1], [], []>} : vector<16x16xf32>, vector<16x16xf32>, vector<16x16xf32> -> vector<16x16xf32>
    %5 = vector.broadcast %0 : vector<1x16xf32> to vector<16x16xf32>
    %6 = arith.addf %5, %4 : vector<16x16xf32>
    %c0_7 = arith.constant 0 : index
    %c0_8 = arith.constant 0 : index
    %7 = vector.load %arg8[%c0_7, %c0_8] : memref<16x16xf32, #tpu.memory_space<vmem>>, vector<16x16xf32>
    %cst_9 = arith.constant dense<0.000000e+00> : vector<16x16xf32>
    %8 = tpu.matmul %2, %7, %cst_9 {dimension_numbers = #tpu.dot_dimension_numbers<[1], [0], [0], [1], [0, 0, 1, 1], [], []>} : vector<16x16xf32>, vector<16x16xf32>, vector<16x16xf32> -> vector<16x16xf32>
    %9 = vector.broadcast %1 : vector<1x16xf32> to vector<16x16xf32>
    %10 = arith.addf %9, %8 : vector<16x16xf32>
    %c0_10 = arith.constant 0 : index
    %c0_11 = arith.constant 0 : index
    %11 = vector.load %arg3[%c0_10, %c0_11] : memref<16x16xf32, #tpu.memory_space<vmem>>, vector<16x16xf32>
    %c0_12 = arith.constant 0 : index
    %c0_13 = arith.constant 0 : index
    %12 = vector.load %arg6[%c0_12, %c0_13] : memref<16x16xf32, #tpu.memory_space<vmem>>, vector<16x16xf32>
    %cst_14 = arith.constant dense<0.000000e+00> : vector<16x16xf32>
    %13 = tpu.matmul %11, %12, %cst_14 {dimension_numbers = #tpu.dot_dimension_numbers<[1], [0], [0], [1], [0, 0, 1, 1], [], []>} : vector<16x16xf32>, vector<16x16xf32>, vector<16x16xf32> -> vector<16x16xf32>
    %14 = arith.addf %6, %13 : vector<16x16xf32>
    %c0_15 = arith.constant 0 : index
    %c0_16 = arith.constant 0 : index
    %15 = vector.load %arg9[%c0_15, %c0_16] : memref<16x16xf32, #tpu.memory_space<vmem>>, vector<16x16xf32>
    %cst_17 = arith.constant dense<0.000000e+00> : vector<16x16xf32>
    %16 = tpu.matmul %11, %15, %cst_17 {dimension_numbers = #tpu.dot_dimension_numbers<[1], [0], [0], [1], [0, 0, 1, 1], [], []>} : vector<16x16xf32>, vector<16x16xf32>, vector<16x16xf32> -> vector<16x16xf32>
    %17 = arith.addf %10, %16 : vector<16x16xf32>
    %c0_18 = arith.constant 0 : index
    %c0_19 = arith.constant 0 : index
    %18 = vector.load %arg4[%c0_18, %c0_19] : memref<16x16xf32, #tpu.memory_space<vmem>>, vector<16x16xf32>
    %c0_20 = arith.constant 0 : index
    %c0_21 = arith.constant 0 : index
    %19 = vector.load %arg7[%c0_20, %c0_21] : memref<16x16xf32, #tpu.memory_space<vmem>>, vector<16x16xf32>
    %cst_22 = arith.constant dense<0.000000e+00> : vector<16x16xf32>
    %20 = tpu.matmul %18, %19, %cst_22 {dimension_numbers = #tpu.dot_dimension_numbers<[1], [0], [0], [1], [0, 0, 1, 1], [], []>} : vector<16x16xf32>, vector<16x16xf32>, vector<16x16xf32> -> vector<16x16xf32>
    %21 = arith.addf %14, %20 : vector<16x16xf32>
    %c0_23 = arith.constant 0 : index
    %c0_24 = arith.constant 0 : index
    %22 = vector.load %arg10[%c0_23, %c0_24] : memref<16x16xf32, #tpu.memory_space<vmem>>, vector<16x16xf32>
    %cst_25 = arith.constant dense<0.000000e+00> : vector<16x16xf32>
    %23 = tpu.matmul %18, %22, %cst_25 {dimension_numbers = #tpu.dot_dimension_numbers<[1], [0], [0], [1], [0, 0, 1, 1], [], []>} : vector<16x16xf32>, vector<16x16xf32>, vector<16x16xf32> -> vector<16x16xf32>
    %24 = arith.addf %17, %23 : vector<16x16xf32>
    %25 = arith.negf %24 : vector<16x16xf32>
    %26 = math.exp %25 : vector<16x16xf32>
    %cst_26 = arith.constant 1.000000e+00 : f32
    %27 = vector.broadcast %cst_26 : f32 to vector<16x16xf32>
    %28 = arith.addf %27, %26 : vector<16x16xf32>
    %29 = arith.divf %27, %28 : vector<16x16xf32>
    %30 = arith.mulf %21, %29 : vector<16x16xf32>
    %c0_27 = arith.constant 0 : index
    %c0_28 = arith.constant 0 : index
    %31 = vector.load %arg13[%c0_27, %c0_28] : memref<16x16xf32, #tpu.memory_space<vmem>>, vector<16x16xf32>
    tpu.vector_store %arg13[%c0_27, %c0_28], %30 {strides = array<i32>} : memref<16x16xf32, #tpu.memory_space<vmem>>, vector<16x16xf32>,
    return
  }
  func.func @transform_0(%arg0: i32, %arg1: i32) -> (i32, i32) {
    %c0_i32 = arith.constant 0 : i32
    %c0_i32_0 = arith.constant 0 : i32
    return %arg0, %c0_i32 : i32, i32
  }
  func.func @transform_1(%arg0: i32, %arg1: i32) -> (i32, i32) {
    %c0_i32 = arith.constant 0 : i32
    %c0_i32_0 = arith.constant 0 : i32
    return %arg0, %c0_i32 : i32, i32
  }
  func.func @transform_2(%arg0: i32, %arg1: i32) -> (i32, i32) {
    %c0_i32 = arith.constant 0 : i32
    %c0_i32_0 = arith.constant 0 : i32
    return %arg0, %c0_i32 : i32, i32
  }
  func.func @transform_3(%arg0: i32, %arg1: i32) -> (i32, i32) {
    %c0_i32 = arith.constant 0 : i32
    %c0_i32_0 = arith.constant 0 : i32
    return %c0_i32, %arg1 : i32, i32
  }
  func.func @transform_4(%arg0: i32, %arg1: i32) -> (i32, i32) {
    %c0_i32 = arith.constant 0 : i32
    %c0_i32_0 = arith.constant 0 : i32
    return %c0_i32, %arg1 : i32, i32
  }
  func.func @transform_5(%arg0: i32, %arg1: i32) -> (i32, i32) {
    %c0_i32 = arith.constant 0 : i32
    %c0_i32_0 = arith.constant 0 : i32
    return %c0_i32, %arg1 : i32, i32
  }
  func.func @transform_6(%arg0: i32, %arg1: i32) -> (i32, i32) {
    %c0_i32 = arith.constant 0 : i32
    %c0_i32_0 = arith.constant 0 : i32
    return %c0_i32, %arg1 : i32, i32
  }
  func.func @transform_7(%arg0: i32, %arg1: i32) -> (i32, i32) {
    %c0_i32 = arith.constant 0 : i32
    %c0_i32_0 = arith.constant 0 : i32
    return %c0_i32, %arg1 : i32, i32
  }
  func.func @transform_8(%arg0: i32, %arg1: i32) -> (i32, i32) {
    %c0_i32 = arith.constant 0 : i32
    %c0_i32_0 = arith.constant 0 : i32
    return %c0_i32, %arg1 : i32, i32
  }
  func.func @transform_9(%arg0: i32, %arg1: i32) -> (i32, i32) {
    %c0_i32 = arith.constant 0 : i32
    %c0_i32_0 = arith.constant 0 : i32
    return %c0_i32, %arg1 : i32, i32
  }
  func.func @transform_10(%arg0: i32, %arg1: i32) -> (i32, i32) {
    %c0_i32 = arith.constant 0 : i32
    %c0_i32_0 = arith.constant 0 : i32
    return %c0_i32, %arg1 : i32, i32
  }
  func.func @transform_11(%arg0: i32, %arg1: i32) -> (i32, i32) {
    %c0_i32 = arith.constant 0 : i32
    return %arg0, %arg1 : i32, i32
  }
}

</mosaic_0001>

<llo_original>
// kernel: tpu_custom_call.1
$region0: #{tpu_custom_call.1}
  #allocation0 [shape = 'u32[]', space=smem, size = 0x4, offset = 0x4, fixed_abs, tag = 'smem constant byte address 0x4 - core index']
  #allocation1 [shape = 'u32[144,128]{1,0:T(1,128)}', space=vmem, size = 0x12000, scoped, tag = 'internal scratch']
  %s0 = inlined_call_operand.hbm [shape: f32[16,16], index: 0, kind: input, shape index: {}]
  %s1 = inlined_call_operand.hbm [shape: f32[16,16], index: 1, kind: input, shape index: {}]
  %s2 = inlined_call_operand.hbm [shape: f32[16,16], index: 2, kind: input, shape index: {}]
  %s3 = inlined_call_operand.hbm [shape: f32[16,16], index: 3, kind: input, shape index: {}]
  %s4 = inlined_call_operand.hbm [shape: f32[16,16], index: 4, kind: input, shape index: {}]
  %s5 = inlined_call_operand.vmem [shape: f32[16,16], index: 5, kind: input, shape index: {}]
  %s6 = inlined_call_operand.hbm [shape: f32[16,16], index: 6, kind: input, shape index: {}]
  %s7 = inlined_call_operand.hbm [shape: f32[16,16], index: 7, kind: input, shape index: {}]
  %s8 = inlined_call_operand.hbm [shape: f32[16,16], index: 8, kind: input, shape index: {}]
  %s9 = inlined_call_operand.vmem [shape: f32[1,16], index: 9, kind: input, shape index: {}]
  %s10 = inlined_call_operand.vmem [shape: f32[1,16], index: 10, kind: input, shape index: {}]
  %s11 = inlined_call_operand.hbm [shape: f32[16,16], index: 11, kind: output, shape index: {}]
  %s12 = sld [smem:[#allocation0]]
  $region86: #{tpu_custom_call.1} parent=0
    _
  %s14 = ssub.s32 1, %s12
  %s15 = scalar_select 0, %s14, %s12
  $region1: #{tpu_custom_call.1} parent=0
    #allocation2 [shape = 'u8[8192]{0}', space=vmem, size = 0x2000, scoped, tag = 'input window, operand 0, single buffered']
    #allocation3 [shape = 's32[1]{0}', space=sflag, size = 0x4, scoped, tag = 'scoped memory for tpu_custom_call.1']
    #allocation4 [shape = 's32[1]{0}', space=sflag, size = 0x4, scoped, tag = 'scoped memory for tpu_custom_call.1']
    #allocation5 [shape = 'u8[8192]{0}', space=vmem, size = 0x2000, scoped, tag = 'input window, operand 1, single buffered']
    #allocation6 [shape = 's32[1]{0}', space=sflag, size = 0x4, scoped, tag = 'scoped memory for tpu_custom_call.1']
    #allocation7 [shape = 'u8[8192]{0}', space=vmem, size = 0x2000, scoped, tag = 'input window, operand 2, single buffered']
    #allocation8 [shape = 'u8[8192]{0}', space=vmem, size = 0x2000, scoped, tag = 'input window, operand 3, single buffered']
    #allocation9 [shape = 's32[1]{0}', space=sflag, size = 0x4, scoped, tag = 'scoped memory for tpu_custom_call.1']
    #allocation10 [shape = 'u8[8192]{0}', space=vmem, size = 0x2000, scoped, tag = 'input window, operand 4, single buffered']
    #allocation11 [shape = 'u8[8192]{0}', space=vmem, size = 0x2000, scoped, tag = 'input window, operand 6, single buffered']
    #allocation12 [shape = 's32[1]{0}', space=sflag, size = 0x4, scoped, tag = 'scoped memory for tpu_custom_call.1']
    #allocation13 [shape = 'u8[8192]{0}', space=vmem, size = 0x2000, scoped, tag = 'input window, operand 7, single buffered']
    #allocation14 [shape = 'u8[8192]{0}', space=vmem, size = 0x2000, scoped, tag = 'input window, operand 8, single buffered']
    #allocation15 [shape = 's32[1]{0}', space=sflag, size = 0x4, scoped, tag = 'scoped memory for tpu_custom_call.1']
    #allocation16 [shape = 'u8[8192]{0}', space=vmem, size = 0x2000, scoped, tag = 'output window, operand 0, single buffered']
    %16 = vsyncpa [#allocation3], 0
    %17 = vsyncpa [#allocation6], 0
    %18 = vsyncpa [#allocation9], 0
    %19 = vsyncpa [#allocation12], 0
    %20 = vsyncpa [#allocation15], 0
    %21 = vsyncpa [#allocation4], 0
    // Predicated region
    $region2: #{tpu_custom_call.1} parent=1 // pred_check
      _
    $region3: #{tpu_custom_call.1} parent=1 // pred_check_branch
      %23 = sbr.rel (0) target = $region5
    $region4: #{tpu_custom_call.1} parent=1 // pred_region
      %s25 = ssub.s32 256, 256
      %26 = vsyncadd [#allocation3], %s25
      %s27 = sshll.u32 [#allocation2], 4
      %s28 = int_to_ptr.vmem [resolvable:$true] %s27
      %33 = dma.hbm_to_vmem [thread:$0]  %s0, 256, %s28, [#allocation3], 128, 128, 8
    $region5: #{tpu_custom_call.1} parent=1 // pred_fallthru
      _
    // Predicated region
    $region6: #{tpu_custom_call.1} parent=1 // pred_check
      _
    $region7: #{tpu_custom_call.1} parent=1 // pred_check_branch
      %35 = sbr.rel (0) target = $region9
    $region8: #{tpu_custom_call.1} parent=1 // pred_region
      %s37 = ssub.s32 256, 256
      %38 = vsyncadd [#allocation6], %s37
      %s39 = sshll.u32 [#allocation5], 4
      %s40 = int_to_ptr.vmem [resolvable:$true] %s39
      %45 = dma.hbm_to_vmem [thread:$0]  %s1, 256, %s40, [#allocation6], 128, 128, 8
    $region9: #{tpu_custom_call.1} parent=1 // pred_fallthru
      _
    // Predicated region
    $region10: #{tpu_custom_call.1} parent=1 // pred_check
      _
    $region11: #{tpu_custom_call.1} parent=1 // pred_check_branch
      %47 = sbr.rel (0) target = $region13
    $region12: #{tpu_custom_call.1} parent=1 // pred_region
      %s49 = ssub.s32 256, 256
      %50 = vsyncadd [#allocation6], %s49
      %s51 = sshll.u32 [#allocation7], 4
      %s52 = int_to_ptr.vmem [resolvable:$true] %s51
      %57 = dma.hbm_to_vmem [thread:$0]  %s2, 256, %s52, [#allocation6], 128, 128, 8
    $region13: #{tpu_custom_call.1} parent=1 // pred_fallthru
      _
    // Predicated region
    $region14: #{tpu_custom_call.1} parent=1 // pred_check
      _
    $region15: #{tpu_custom_call.1} parent=1 // pred_check_branch
      %59 = sbr.rel (0) target = $region17
    $region16: #{tpu_custom_call.1} parent=1 // pred_region
      %s61 = ssub.s32 256, 256
      %62 = vsyncadd [#allocation9], %s61
      %s63 = sshll.u32 [#allocation8], 4
      %s64 = int_to_ptr.vmem [resolvable:$true] %s63
      %69 = dma.hbm_to_vmem [thread:$0]  %s3, 256, %s64, [#allocation9], 128, 128, 8
    $region17: #{tpu_custom_call.1} parent=1 // pred_fallthru
      _
    // Predicated region
    $region18: #{tpu_custom_call.1} parent=1 // pred_check
      _
    $region19: #{tpu_custom_call.1} parent=1 // pred_check_branch
      %71 = sbr.rel (0) target = $region21
    $region20: #{tpu_custom_call.1} parent=1 // pred_region
      %s73 = ssub.s32 256, 256
      %74 = vsyncadd [#allocation9], %s73
      %s75 = sshll.u32 [#allocation10], 4
      %s76 = int_to_ptr.vmem [resolvable:$true] %s75
      %81 = dma.hbm_to_vmem [thread:$0]  %s4, 256, %s76, [#allocation9], 128, 128, 8
    $region21: #{tpu_custom_call.1} parent=1 // pred_fallthru
      _
    // Predicated region
    $region22: #{tpu_custom_call.1} parent=1 // pred_check
      _
    $region23: #{tpu_custom_call.1} parent=1 // pred_check_branch
      %83 = sbr.rel (0) target = $region25
    $region24: #{tpu_custom_call.1} parent=1 // pred_region
      _
    $region25: #{tpu_custom_call.1} parent=1 // pred_fallthru
      _
    // Predicated region
    $region26: #{tpu_custom_call.1} parent=1 // pred_check
      _
    $region27: #{tpu_custom_call.1} parent=1 // pred_check_branch
      %85 = sbr.rel (0) target = $region29
    $region28: #{tpu_custom_call.1} parent=1 // pred_region
      %s87 = ssub.s32 256, 256
      %88 = vsyncadd [#allocation12], %s87
      %s89 = sshll.u32 [#allocation11], 4
      %s90 = int_to_ptr.vmem [resolvable:$true] %s89
      %95 = dma.hbm_to_vmem [thread:$0]  %s6, 256, %s90, [#allocation12], 128, 128, 8
    $region29: #{tpu_custom_call.1} parent=1 // pred_fallthru
      _
    // Predicated region
    $region30: #{tpu_custom_call.1} parent=1 // pred_check
      _
    $region31: #{tpu_custom_call.1} parent=1 // pred_check_branch
      %97 = sbr.rel (0) target = $region33
    $region32: #{tpu_custom_call.1} parent=1 // pred_region
      %s99 = ssub.s32 256, 256
      %100 = vsyncadd [#allocation12], %s99
      %s101 = sshll.u32 [#allocation13], 4
      %s102 = int_to_ptr.vmem [resolvable:$true] %s101
      %107 = dma.hbm_to_vmem [thread:$0]  %s7, 256, %s102, [#allocation12], 128, 128, 8
    $region33: #{tpu_custom_call.1} parent=1 // pred_fallthru
      _
    // Predicated region
    $region34: #{tpu_custom_call.1} parent=1 // pred_check
      _
    $region35: #{tpu_custom_call.1} parent=1 // pred_check_branch
      %109 = sbr.rel (0) target = $region37
    $region36: #{tpu_custom_call.1} parent=1 // pred_region
      %s111 = ssub.s32 256, 256
      %112 = vsyncadd [#allocation15], %s111
      %s113 = sshll.u32 [#allocation14], 4
      %s114 = int_to_ptr.vmem [resolvable:$true] %s113
      %119 = dma.hbm_to_vmem [thread:$0]  %s8, 256, %s114, [#allocation15], 128, 128, 8
    $region37: #{tpu_custom_call.1} parent=1 // pred_fallthru
      _
    // Predicated region
    $region38: #{tpu_custom_call.1} parent=1 // pred_check
      _
    $region39: #{tpu_custom_call.1} parent=1 // pred_check_branch
      %121 = sbr.rel (0) target = $region41
    $region40: #{tpu_custom_call.1} parent=1 // pred_region
      _
    $region41: #{tpu_custom_call.1} parent=1 // pred_fallthru
      _
    // Predicated region
    $region42: #{tpu_custom_call.1} parent=1 // pred_check
      _
    $region43: #{tpu_custom_call.1} parent=1 // pred_check_branch
      %123 = sbr.rel (0) target = $region45
    $region44: #{tpu_custom_call.1} parent=1 // pred_region
      _
    $region45: #{tpu_custom_call.1} parent=1 // pred_fallthru
      _
    // Predicated region
    $region46: #{tpu_custom_call.1} parent=1 // pred_check
      _
    $region47: #{tpu_custom_call.1} parent=1 // pred_check_branch
      %125 = sbr.rel (0) target = $region49
    $region48: #{tpu_custom_call.1} parent=1 // pred_region
      %126 = dma.done [#allocation3], 256
    $region49: #{tpu_custom_call.1} parent=1 // pred_fallthru
      _
    // Predicated region
    $region50: #{tpu_custom_call.1} parent=1 // pred_check
      _
    $region51: #{tpu_custom_call.1} parent=1 // pred_check_branch
      %128 = sbr.rel (0) target = $region53
    $region52: #{tpu_custom_call.1} parent=1 // pred_region
      %129 = dma.done [#allocation6], 256
    $region53: #{tpu_custom_call.1} parent=1 // pred_fallthru
      _
    // Predicated region
    $region54: #{tpu_custom_call.1} parent=1 // pred_check
      _
    $region55: #{tpu_custom_call.1} parent=1 // pred_check_branch
      %131 = sbr.rel (0) target = $region57
    $region56: #{tpu_custom_call.1} parent=1 // pred_region
      %132 = dma.done [#allocation6], 256
    $region57: #{tpu_custom_call.1} parent=1 // pred_fallthru
      _
    // Predicated region
    $region58: #{tpu_custom_call.1} parent=1 // pred_check
      _
    $region59: #{tpu_custom_call.1} parent=1 // pred_check_branch
      %134 = sbr.rel (0) target = $region61
    $region60: #{tpu_custom_call.1} parent=1 // pred_region
      %135 = dma.done [#allocation9], 256
    $region61: #{tpu_custom_call.1} parent=1 // pred_fallthru
      _
    // Predicated region
    $region62: #{tpu_custom_call.1} parent=1 // pred_check
      _
    $region63: #{tpu_custom_call.1} parent=1 // pred_check_branch
      %137 = sbr.rel (0) target = $region65
    $region64: #{tpu_custom_call.1} parent=1 // pred_region
      %138 = dma.done [#allocation9], 256
    $region65: #{tpu_custom_call.1} parent=1 // pred_fallthru
      _
    // Predicated region
    $region66: #{tpu_custom_call.1} parent=1 // pred_check
      _
    $region67: #{tpu_custom_call.1} parent=1 // pred_check_branch
      %140 = sbr.rel (0) target = $region69
    $region68: #{tpu_custom_call.1} parent=1 // pred_region
      %141 = dma.done [#allocation12], 256
    $region69: #{tpu_custom_call.1} parent=1 // pred_fallthru
      _
    // Predicated region
    $region70: #{tpu_custom_call.1} parent=1 // pred_check
      _
    $region71: #{tpu_custom_call.1} parent=1 // pred_check_branch
      %143 = sbr.rel (0) target = $region73
    $region72: #{tpu_custom_call.1} parent=1 // pred_region
      %144 = dma.done [#allocation12], 256
    $region73: #{tpu_custom_call.1} parent=1 // pred_fallthru
      _
    // Predicated region
    $region74: #{tpu_custom_call.1} parent=1 // pred_check
      _
    $region75: #{tpu_custom_call.1} parent=1 // pred_check_branch
      %146 = sbr.rel (0) target = $region77
    $region76: #{tpu_custom_call.1} parent=1 // pred_region
      %147 = dma.done [#allocation15], 256
    $region77: #{tpu_custom_call.1} parent=1 // pred_fallthru
      _
    %v148 = vld [vmem:[%s9] sm:$0x1]
    %v149 = vld [vmem:[%s10] sm:$0x1]
    %v150 = vld [vmem:[#allocation2] sm:$0xff]
    %v151 = vld [vmem:[#allocation2 + $0x8] sm:$0xff]
    %v152 = vld [vmem:[#allocation8] sm:$0xff]
    %v153 = vld [vmem:[#allocation8 + $0x8] sm:$0xff]
    %vm154 = vcmask 130048
    %v156 = vsel %vm154, %v150, 0
    %v159 = vsel %vm154, %v151, 0
    %161 = vmatprep.subr.mxu0 0.0
    %162 = vmatpush1.msra.mxu0 %v152
    %163 = vmatprep.subr.mxu0 0.0
    %164 = vmatpush1.msra.mxu0 %v153
    %165 = vmatprep.subr.mxu0 0.0
    %166 = vmatpush1.msra.mxu0 0.0
    %167 = vmatprep.subr.mxu0 0.0
    %168 = vmatpush1.msra.mxu0 0.0
    %169 = vmatprep.subr.mxu0 0.0
    %170 = vmatpush1.msra.mxu0 0.0
    %171 = vmatprep.subr.mxu0 0.0
    %172 = vmatpush1.msra.mxu0 0.0
    %173 = vmatprep.subr.mxu0 0.0
    %174 = vmatpush1.msra.mxu0 0.0
    %175 = vmatprep.subr.mxu0 0.0
    %176 = vmatpush1.msra.mxu0 0.0
    %177 = vmatprep.subr.mxu0 0.0
    %178 = vmatpush1.msra.mxu0 0.0
    %179 = vmatprep.subr.mxu0 0.0
    %180 = vmatpush1.msra.mxu0 0.0
    %181 = vmatprep.subr.mxu0 0.0
    %182 = vmatpush1.msra.mxu0 0.0
    %183 = vmatprep.subr.mxu0 0.0
    %184 = vmatpush1.msra.mxu0 0.0
    %185 = vmatprep.subr.mxu0 0.0
    %186 = vmatpush1.msra.mxu0 0.0
    %187 = vmatprep.subr.mxu0 0.0
    %188 = vmatpush1.msra.mxu0 0.0
    %189 = vmatprep.subr.mxu0 0.0
    %190 = vmatpush1.msra.mxu0 0.0
    %191 = vmatprep.subr.mxu0 0.0
    %192 = vmatpush1.msra.mxu0 0.0
    %193 = vmatprep.subr.mxu0 0.0
    %194 = vmatpush1.msra.mxu0 0.0
    %195 = vmatprep.subr.mxu0 0.0
    %196 = vmatpush1.msra.mxu0 0.0
    %197 = vmatprep.subr.mxu0 0.0
    %198 = vmatpush1.msra.mxu0 0.0
    %199 = vmatprep.subr.mxu0 0.0
    %200 = vmatpush1.msra.mxu0 0.0
    %201 = vmatprep.subr.mxu0 0.0
    %202 = vmatpush1.msra.mxu0 0.0
    %203 = vmatprep.subr.mxu0 0.0
    %204 = vmatpush1.msra.mxu0 0.0
    %205 = vmatprep.subr.mxu0 0.0
    %206 = vmatpush1.msra.mxu0 0.0
    %207 = vmatprep.subr.mxu0 0.0
    %208 = vmatpush1.msra.mxu0 0.0
    %209 = vmatprep.subr.mxu0 0.0
    %210 = vmatpush1.msra.mxu0 0.0
    %211 = vmatprep.subr.mxu0 0.0
    %212 = vmatpush1.msra.mxu0 0.0
    %213 = vmatprep.subr.mxu0 0.0
    %214 = vmatpush1.msra.mxu0 0.0
    %215 = vmatprep.subr.mxu0 0.0
    %216 = vmatpush1.msra.mxu0 0.0
    %217 = vmatprep.subr.mxu0 0.0
    %218 = vmatpush1.msra.mxu0 0.0
    %219 = vmatprep.subr.mxu0 0.0
    %220 = vmatpush1.msra.mxu0 0.0
    %221 = vmatprep.subr.mxu0 0.0
    %222 = vmatpush1.msra.mxu0 0.0
    %223 = vmatprep.subr.mxu0 0.0
    %224 = vmatpush1.msra.mxu0 0.0
    %225 = vmatprep.mubr.f32.mxu0 0.0
    %226 = vmatmul.mubr.f32.gmra.mrb[0].mxu0 %v156
    %v227 = vpop.f32.mrb[0].mxu0
    %v228 = vadd.f32 0.0, %v227
    %v229 = vpop.f32.mrb[0].mxu0
    %230 = vmatprep.mubr.f32.mxu0 0.0
    %231 = vmatmul.mubr.f32.gmra.mrb[0].mxu0 %v159
    %v232 = vpop.f32.mrb[0].mxu0
    %v233 = vadd.f32 0.0, %v232
    %v234 = vpop.f32.mrb[0].mxu0
    %235 = vdwg.mxu0
    %v237 = vlaneseq
    %v238 = vshrl.u32 %v237, 7
    %v239 = vsub.s32 0, %v238
    %v240 = vrot.slane %v148, %v239
    %v242 = vadd.f32 %v240, %v228
    %v243 = vadd.f32 %v240, %v233
    %v244 = vld [vmem:[#allocation11] sm:$0xff]
    %v245 = vld [vmem:[#allocation11 + $0x8] sm:$0xff]
    %246 = vmatprep.subr.mxu0 0.0
    %247 = vmatpush1.msra.mxu0 %v244
    %248 = vmatprep.subr.mxu0 0.0
    %249 = vmatpush1.msra.mxu0 %v245
    %250 = vmatprep.subr.mxu0 0.0
    %251 = vmatpush1.msra.mxu0 0.0
    %252 = vmatprep.subr.mxu0 0.0
    %253 = vmatpush1.msra.mxu0 0.0
    %254 = vmatprep.subr.mxu0 0.0
    %255 = vmatpush1.msra.mxu0 0.0
    %256 = vmatprep.subr.mxu0 0.0
    %257 = vmatpush1.msra.mxu0 0.0
    %258 = vmatprep.subr.mxu0 0.0
    %259 = vmatpush1.msra.mxu0 0.0
    %260 = vmatprep.subr.mxu0 0.0
    %261 = vmatpush1.msra.mxu0 0.0
    %262 = vmatprep.subr.mxu0 0.0
    %263 = vmatpush1.msra.mxu0 0.0
    %264 = vmatprep.subr.mxu0 0.0
    %265 = vmatpush1.msra.mxu0 0.0
    %266 = vmatprep.subr.mxu0 0.0
    %267 = vmatpush1.msra.mxu0 0.0
    %268 = vmatprep.subr.mxu0 0.0
    %269 = vmatpush1.msra.mxu0 0.0
    %270 = vmatprep.subr.mxu0 0.0
    %271 = vmatpush1.msra.mxu0 0.0
    %272 = vmatprep.subr.mxu0 0.0
    %273 = vmatpush1.msra.mxu0 0.0
    %274 = vmatprep.subr.mxu0 0.0
    %275 = vmatpush1.msra.mxu0 0.0
    %276 = vmatprep.subr.mxu0 0.0
    %277 = vmatpush1.msra.mxu0 0.0
    %278 = vmatprep.subr.mxu0 0.0
    %279 = vmatpush1.msra.mxu0 0.0
    %280 = vmatprep.subr.mxu0 0.0
    %281 = vmatpush1.msra.mxu0 0.0
    %282 = vmatprep.subr.mxu0 0.0
    %283 = vmatpush1.msra.mxu0 0.0
    %284 = vmatprep.subr.mxu0 0.0
    %285 = vmatpush1.msra.mxu0 0.0
    %286 = vmatprep.subr.mxu0 0.0
    %287 = vmatpush1.msra.mxu0 0.0
    %288 = vmatprep.subr.mxu0 0.0
    %289 = vmatpush1.msra.mxu0 0.0
    %290 = vmatprep.subr.mxu0 0.0
    %291 = vmatpush1.msra.mxu0 0.0
    %292 = vmatprep.subr.mxu0 0.0
    %293 = vmatpush1.msra.mxu0 0.0
    %294 = vmatprep.subr.mxu0 0.0
    %295 = vmatpush1.msra.mxu0 0.0
    %296 = vmatprep.subr.mxu0 0.0
    %297 = vmatpush1.msra.mxu0 0.0
    %298 = vmatprep.subr.mxu0 0.0
    %299 = vmatpush1.msra.mxu0 0.0
    %300 = vmatprep.subr.mxu0 0.0
    %301 = vmatpush1.msra.mxu0 0.0
    %302 = vmatprep.subr.mxu0 0.0
    %303 = vmatpush1.msra.mxu0 0.0
    %304 = vmatprep.subr.mxu0 0.0
    %305 = vmatpush1.msra.mxu0 0.0
    %306 = vmatprep.subr.mxu0 0.0
    %307 = vmatpush1.msra.mxu0 0.0
    %308 = vmatprep.subr.mxu0 0.0
    %309 = vmatpush1.msra.mxu0 0.0
    %310 = vmatprep.mubr.f32.mxu0 0.0
    %311 = vmatmul.mubr.f32.gmra.mrb[0].mxu0 %v156
    %v312 = vpop.f32.mrb[0].mxu0
    %v313 = vadd.f32 0.0, %v312
    %v314 = vpop.f32.mrb[0].mxu0
    %315 = vmatprep.mubr.f32.mxu0 0.0
    %316 = vmatmul.mubr.f32.gmra.mrb[0].mxu0 %v159
    %v317 = vpop.f32.mrb[0].mxu0
    %v318 = vadd.f32 0.0, %v317
    %v319 = vpop.f32.mrb[0].mxu0
    %320 = vdwg.mxu0
    %v322 = vlaneseq
    %v323 = vshrl.u32 %v322, 7
    %v324 = vsub.s32 0, %v323
    %v325 = vrot.slane %v149, %v324
    %v327 = vadd.f32 %v325, %v313
    %v328 = vadd.f32 %v325, %v318
    %v329 = vld [vmem:[#allocation5] sm:$0xff]
    %v330 = vld [vmem:[#allocation5 + $0x8] sm:$0xff]
    %v331 = vld [vmem:[#allocation10] sm:$0xff]
    %v332 = vld [vmem:[#allocation10 + $0x8] sm:$0xff]
    %v334 = vsel %vm154, %v329, 0
    %v337 = vsel %vm154, %v330, 0
    %339 = vmatprep.subr.mxu0 0.0
    %340 = vmatpush1.msra.mxu0 %v331
    %341 = vmatprep.subr.mxu0 0.0
    %342 = vmatpush1.msra.mxu0 %v332
    %343 = vmatprep.subr.mxu0 0.0
    %344 = vmatpush1.msra.mxu0 0.0
    %345 = vmatprep.subr.mxu0 0.0
    %346 = vmatpush1.msra.mxu0 0.0
    %347 = vmatprep.subr.mxu0 0.0
    %348 = vmatpush1.msra.mxu0 0.0
    %349 = vmatprep.subr.mxu0 0.0
    %350 = vmatpush1.msra.mxu0 0.0
    %351 = vmatprep.subr.mxu0 0.0
    %352 = vmatpush1.msra.mxu0 0.0
    %353 = vmatprep.subr.mxu0 0.0
    %354 = vmatpush1.msra.mxu0 0.0
    %355 = vmatprep.subr.mxu0 0.0
    %356 = vmatpush1.msra.mxu0 0.0
    %357 = vmatprep.subr.mxu0 0.0
    %358 = vmatpush1.msra.mxu0 0.0
    %359 = vmatprep.subr.mxu0 0.0
    %360 = vmatpush1.msra.mxu0 0.0
    %361 = vmatprep.subr.mxu0 0.0
    %362 = vmatpush1.msra.mxu0 0.0
    %363 = vmatprep.subr.mxu0 0.0
    %364 = vmatpush1.msra.mxu0 0.0
    %365 = vmatprep.subr.mxu0 0.0
    %366 = vmatpush1.msra.mxu0 0.0
    %367 = vmatprep.subr.mxu0 0.0
    %368 = vmatpush1.msra.mxu0 0.0
    %369 = vmatprep.subr.mxu0 0.0
    %370 = vmatpush1.msra.mxu0 0.0
    %371 = vmatprep.subr.mxu0 0.0
    %372 = vmatpush1.msra.mxu0 0.0
    %373 = vmatprep.subr.mxu0 0.0
    %374 = vmatpush1.msra.mxu0 0.0
    %375 = vmatprep.subr.mxu0 0.0
    %376 = vmatpush1.msra.mxu0 0.0
    %377 = vmatprep.subr.mxu0 0.0
    %378 = vmatpush1.msra.mxu0 0.0
    %379 = vmatprep.subr.mxu0 0.0
    %380 = vmatpush1.msra.mxu0 0.0
    %381 = vmatprep.subr.mxu0 0.0
    %382 = vmatpush1.msra.mxu0 0.0
    %383 = vmatprep.subr.mxu0 0.0
    %384 = vmatpush1.msra.mxu0 0.0
    %385 = vmatprep.subr.mxu0 0.0
    %386 = vmatpush1.msra.mxu0 0.0
    %387 = vmatprep.subr.mxu0 0.0
    %388 = vmatpush1.msra.mxu0 0.0
    %389 = vmatprep.subr.mxu0 0.0
    %390 = vmatpush1.msra.mxu0 0.0
    %391 = vmatprep.subr.mxu0 0.0
    %392 = vmatpush1.msra.mxu0 0.0
    %393 = vmatprep.subr.mxu0 0.0
    %394 = vmatpush1.msra.mxu0 0.0
    %395 = vmatprep.subr.mxu0 0.0
    %396 = vmatpush1.msra.mxu0 0.0
    %397 = vmatprep.subr.mxu0 0.0
    %398 = vmatpush1.msra.mxu0 0.0
    %399 = vmatprep.subr.mxu0 0.0
    %400 = vmatpush1.msra.mxu0 0.0
    %401 = vmatprep.subr.mxu0 0.0
    %402 = vmatpush1.msra.mxu0 0.0
    %403 = vmatprep.mubr.f32.mxu0 0.0
    %404 = vmatmul.mubr.f32.gmra.mrb[0].mxu0 %v334
    %v405 = vpop.f32.mrb[0].mxu0
    %v406 = vadd.f32 0.0, %v405
    %v407 = vpop.f32.mrb[0].mxu0
    %408 = vmatprep.mubr.f32.mxu0 0.0
    %409 = vmatmul.mubr.f32.gmra.mrb[0].mxu0 %v337
    %v410 = vpop.f32.mrb[0].mxu0
    %v411 = vadd.f32 0.0, %v410
    %v412 = vpop.f32.mrb[0].mxu0
    %413 = vdwg.mxu0
    %v414 = vadd.f32 %v242, %v406
    %v415 = vadd.f32 %v243, %v411
    %v416 = vld [vmem:[#allocation13] sm:$0xff]
    %v417 = vld [vmem:[#allocation13 + $0x8] sm:$0xff]
    %418 = vmatprep.subr.mxu0 0.0
    %419 = vmatpush1.msra.mxu0 %v416
    %420 = vmatprep.subr.mxu0 0.0
    %421 = vmatpush1.msra.mxu0 %v417
    %422 = vmatprep.subr.mxu0 0.0
    %423 = vmatpush1.msra.mxu0 0.0
    %424 = vmatprep.subr.mxu0 0.0
    %425 = vmatpush1.msra.mxu0 0.0
    %426 = vmatprep.subr.mxu0 0.0
    %427 = vmatpush1.msra.mxu0 0.0
    %428 = vmatprep.subr.mxu0 0.0
    %429 = vmatpush1.msra.mxu0 0.0
    %430 = vmatprep.subr.mxu0 0.0
    %431 = vmatpush1.msra.mxu0 0.0
    %432 = vmatprep.subr.mxu0 0.0
    %433 = vmatpush1.msra.mxu0 0.0
    %434 = vmatprep.subr.mxu0 0.0
    %435 = vmatpush1.msra.mxu0 0.0
    %436 = vmatprep.subr.mxu0 0.0
    %437 = vmatpush1.msra.mxu0 0.0
    %438 = vmatprep.subr.mxu0 0.0
    %439 = vmatpush1.msra.mxu0 0.0
    %440 = vmatprep.subr.mxu0 0.0
    %441 = vmatpush1.msra.mxu0 0.0
    %442 = vmatprep.subr.mxu0 0.0
    %443 = vmatpush1.msra.mxu0 0.0
    %444 = vmatprep.subr.mxu0 0.0
    %445 = vmatpush1.msra.mxu0 0.0
    %446 = vmatprep.subr.mxu0 0.0
    %447 = vmatpush1.msra.mxu0 0.0
    %448 = vmatprep.subr.mxu0 0.0
    %449 = vmatpush1.msra.mxu0 0.0
    %450 = vmatprep.subr.mxu0 0.0
    %451 = vmatpush1.msra.mxu0 0.0
    %452 = vmatprep.subr.mxu0 0.0
    %453 = vmatpush1.msra.mxu0 0.0
    %454 = vmatprep.subr.mxu0 0.0
    %455 = vmatpush1.msra.mxu0 0.0
    %456 = vmatprep.subr.mxu0 0.0
    %457 = vmatpush1.msra.mxu0 0.0
    %458 = vmatprep.subr.mxu0 0.0
    %459 = vmatpush1.msra.mxu0 0.0
    %460 = vmatprep.subr.mxu0 0.0
    %461 = vmatpush1.msra.mxu0 0.0
    %462 = vmatprep.subr.mxu0 0.0
    %463 = vmatpush1.msra.mxu0 0.0
    %464 = vmatprep.subr.mxu0 0.0
    %465 = vmatpush1.msra.mxu0 0.0
    %466 = vmatprep.subr.mxu0 0.0
    %467 = vmatpush1.msra.mxu0 0.0
    %468 = vmatprep.subr.mxu0 0.0
    %469 = vmatpush1.msra.mxu0 0.0
    %470 = vmatprep.subr.mxu0 0.0
    %471 = vmatpush1.msra.mxu0 0.0
    %472 = vmatprep.subr.mxu0 0.0
    %473 = vmatpush1.msra.mxu0 0.0
    %474 = vmatprep.subr.mxu0 0.0
    %475 = vmatpush1.msra.mxu0 0.0
    %476 = vmatprep.subr.mxu0 0.0
    %477 = vmatpush1.msra.mxu0 0.0
    %478 = vmatprep.subr.mxu0 0.0
    %479 = vmatpush1.msra.mxu0 0.0
    %480 = vmatprep.subr.mxu0 0.0
    %481 = vmatpush1.msra.mxu0 0.0
    %482 = vmatprep.mubr.f32.mxu0 0.0
    %483 = vmatmul.mubr.f32.gmra.mrb[0].mxu0 %v334
    %v484 = vpop.f32.mrb[0].mxu0
    %v485 = vadd.f32 0.0, %v484
    %v486 = vpop.f32.mrb[0].mxu0
    %487 = vmatprep.mubr.f32.mxu0 0.0
    %488 = vmatmul.mubr.f32.gmra.mrb[0].mxu0 %v337
    %v489 = vpop.f32.mrb[0].mxu0
    %v490 = vadd.f32 0.0, %v489
    %v491 = vpop.f32.mrb[0].mxu0
    %492 = vdwg.mxu0
    %v493 = vadd.f32 %v327, %v485
    %v494 = vadd.f32 %v328, %v490
    %v495 = vld [vmem:[#allocation7] sm:$0xff]
    %v496 = vld [vmem:[#allocation7 + $0x8] sm:$0xff]
    %v497 = vld [vmem:[%s5] sm:$0xff]
    %v498 = vld [vmem:[%s5 + $0x8] sm:$0xff]
    %v500 = vsel %vm154, %v495, 0
    %v503 = vsel %vm154, %v496, 0
    %505 = vmatprep.subr.mxu0 0.0
    %506 = vmatpush1.msra.mxu0 %v497
    %507 = vmatprep.subr.mxu0 0.0
    %508 = vmatpush1.msra.mxu0 %v498
    %509 = vmatprep.subr.mxu0 0.0
    %510 = vmatpush1.msra.mxu0 0.0
    %511 = vmatprep.subr.mxu0 0.0
    %512 = vmatpush1.msra.mxu0 0.0
    %513 = vmatprep.subr.mxu0 0.0
    %514 = vmatpush1.msra.mxu0 0.0
    %515 = vmatprep.subr.mxu0 0.0
    %516 = vmatpush1.msra.mxu0 0.0
    %517 = vmatprep.subr.mxu0 0.0
    %518 = vmatpush1.msra.mxu0 0.0
    %519 = vmatprep.subr.mxu0 0.0
    %520 = vmatpush1.msra.mxu0 0.0
    %521 = vmatprep.subr.mxu0 0.0
    %522 = vmatpush1.msra.mxu0 0.0
    %523 = vmatprep.subr.mxu0 0.0
    %524 = vmatpush1.msra.mxu0 0.0
    %525 = vmatprep.subr.mxu0 0.0
    %526 = vmatpush1.msra.mxu0 0.0
    %527 = vmatprep.subr.mxu0 0.0
    %528 = vmatpush1.msra.mxu0 0.0
    %529 = vmatprep.subr.mxu0 0.0
    %530 = vmatpush1.msra.mxu0 0.0
    %531 = vmatprep.subr.mxu0 0.0
    %532 = vmatpush1.msra.mxu0 0.0
    %533 = vmatprep.subr.mxu0 0.0
    %534 = vmatpush1.msra.mxu0 0.0
    %535 = vmatprep.subr.mxu0 0.0
    %536 = vmatpush1.msra.mxu0 0.0
    %537 = vmatprep.subr.mxu0 0.0
    %538 = vmatpush1.msra.mxu0 0.0
    %539 = vmatprep.subr.mxu0 0.0
    %540 = vmatpush1.msra.mxu0 0.0
    %541 = vmatprep.subr.mxu0 0.0
    %542 = vmatpush1.msra.mxu0 0.0
    %543 = vmatprep.subr.mxu0 0.0
    %544 = vmatpush1.msra.mxu0 0.0
    %545 = vmatprep.subr.mxu0 0.0
    %546 = vmatpush1.msra.mxu0 0.0
    %547 = vmatprep.subr.mxu0 0.0
    %548 = vmatpush1.msra.mxu0 0.0
    %549 = vmatprep.subr.mxu0 0.0
    %550 = vmatpush1.msra.mxu0 0.0
    %551 = vmatprep.subr.mxu0 0.0
    %552 = vmatpush1.msra.mxu0 0.0
    %553 = vmatprep.subr.mxu0 0.0
    %554 = vmatpush1.msra.mxu0 0.0
    %555 = vmatprep.subr.mxu0 0.0
    %556 = vmatpush1.msra.mxu0 0.0
    %557 = vmatprep.subr.mxu0 0.0
    %558 = vmatpush1.msra.mxu0 0.0
    %559 = vmatprep.subr.mxu0 0.0
    %560 = vmatpush1.msra.mxu0 0.0
    %561 = vmatprep.subr.mxu0 0.0
    %562 = vmatpush1.msra.mxu0 0.0
    %563 = vmatprep.subr.mxu0 0.0
    %564 = vmatpush1.msra.mxu0 0.0
    %565 = vmatprep.subr.mxu0 0.0
    %566 = vmatpush1.msra.mxu0 0.0
    %567 = vmatprep.subr.mxu0 0.0
    %568 = vmatpush1.msra.mxu0 0.0
    %569 = vmatprep.mubr.f32.mxu0 0.0
    %570 = vmatmul.mubr.f32.gmra.mrb[0].mxu0 %v500
    %v571 = vpop.f32.mrb[0].mxu0
    %v572 = vadd.f32 0.0, %v571
    %v573 = vpop.f32.mrb[0].mxu0
    %574 = vmatprep.mubr.f32.mxu0 0.0
    %575 = vmatmul.mubr.f32.gmra.mrb[0].mxu0 %v503
    %v576 = vpop.f32.mrb[0].mxu0
    %v577 = vadd.f32 0.0, %v576
    %v578 = vpop.f32.mrb[0].mxu0
    %579 = vdwg.mxu0
    %v580 = vadd.f32 %v414, %v572
    %v581 = vadd.f32 %v415, %v577
    %v582 = vld [vmem:[#allocation14] sm:$0xff]
    %v583 = vld [vmem:[#allocation14 + $0x8] sm:$0xff]
    %584 = vmatprep.subr.mxu0 0.0
    %585 = vmatpush1.msra.mxu0 %v582
    %586 = vmatprep.subr.mxu0 0.0
    %587 = vmatpush1.msra.mxu0 %v583
    %588 = vmatprep.subr.mxu0 0.0
    %589 = vmatpush1.msra.mxu0 0.0
    %590 = vmatprep.subr.mxu0 0.0
    %591 = vmatpush1.msra.mxu0 0.0
    %592 = vmatprep.subr.mxu0 0.0
    %593 = vmatpush1.msra.mxu0 0.0
    %594 = vmatprep.subr.mxu0 0.0
    %595 = vmatpush1.msra.mxu0 0.0
    %596 = vmatprep.subr.mxu0 0.0
    %597 = vmatpush1.msra.mxu0 0.0
    %598 = vmatprep.subr.mxu0 0.0
    %599 = vmatpush1.msra.mxu0 0.0
    %600 = vmatprep.subr.mxu0 0.0
    %601 = vmatpush1.msra.mxu0 0.0
    %602 = vmatprep.subr.mxu0 0.0
    %603 = vmatpush1.msra.mxu0 0.0
    %604 = vmatprep.subr.mxu0 0.0
    %605 = vmatpush1.msra.mxu0 0.0
    %606 = vmatprep.subr.mxu0 0.0
    %607 = vmatpush1.msra.mxu0 0.0
    %608 = vmatprep.subr.mxu0 0.0
    %609 = vmatpush1.msra.mxu0 0.0
    %610 = vmatprep.subr.mxu0 0.0
    %611 = vmatpush1.msra.mxu0 0.0
    %612 = vmatprep.subr.mxu0 0.0
    %613 = vmatpush1.msra.mxu0 0.0
    %614 = vmatprep.subr.mxu0 0.0
    %615 = vmatpush1.msra.mxu0 0.0
    %616 = vmatprep.subr.mxu0 0.0
    %617 = vmatpush1.msra.mxu0 0.0
    %618 = vmatprep.subr.mxu0 0.0
    %619 = vmatpush1.msra.mxu0 0.0
    %620 = vmatprep.subr.mxu0 0.0
    %621 = vmatpush1.msra.mxu0 0.0
    %622 = vmatprep.subr.mxu0 0.0
    %623 = vmatpush1.msra.mxu0 0.0
    %624 = vmatprep.subr.mxu0 0.0
    %625 = vmatpush1.msra.mxu0 0.0
    %626 = vmatprep.subr.mxu0 0.0
    %627 = vmatpush1.msra.mxu0 0.0
    %628 = vmatprep.subr.mxu0 0.0
    %629 = vmatpush1.msra.mxu0 0.0
    %630 = vmatprep.subr.mxu0 0.0
    %631 = vmatpush1.msra.mxu0 0.0
    %632 = vmatprep.subr.mxu0 0.0
    %633 = vmatpush1.msra.mxu0 0.0
    %634 = vmatprep.subr.mxu0 0.0
    %635 = vmatpush1.msra.mxu0 0.0
    %636 = vmatprep.subr.mxu0 0.0
    %637 = vmatpush1.msra.mxu0 0.0
    %638 = vmatprep.subr.mxu0 0.0
    %639 = vmatpush1.msra.mxu0 0.0
    %640 = vmatprep.subr.mxu0 0.0
    %641 = vmatpush1.msra.mxu0 0.0
    %642 = vmatprep.subr.mxu0 0.0
    %643 = vmatpush1.msra.mxu0 0.0
    %644 = vmatprep.subr.mxu0 0.0
    %645 = vmatpush1.msra.mxu0 0.0
    %646 = vmatprep.subr.mxu0 0.0
    %647 = vmatpush1.msra.mxu0 0.0
    %648 = vmatprep.mubr.f32.mxu0 0.0
    %649 = vmatmul.mubr.f32.gmra.mrb[0].mxu0 %v500
    %v650 = vpop.f32.mrb[0].mxu0
    %v651 = vadd.f32 0.0, %v650
    %v652 = vpop.f32.mrb[0].mxu0
    %653 = vmatprep.mubr.f32.mxu0 0.0
    %654 = vmatmul.mubr.f32.gmra.mrb[0].mxu0 %v503
    %v655 = vpop.f32.mrb[0].mxu0
    %v656 = vadd.f32 0.0, %v655
    %v657 = vpop.f32.mrb[0].mxu0
    %658 = vdwg.mxu0
    %v659 = vadd.f32 %v493, %v651
    %v660 = vadd.f32 %v494, %v656
    %v661 = vxor.u32 %v659, 2147483648
    %v662 = vxor.u32 %v660, 2147483648
    %v663 = vmul.f32 %v661, 1.442695
    %v664 = vpow.pop %v663
    %v665 = vmul.f32 %v662, 1.442695
    %v666 = vpow.pop %v665
    %v667 = vadd.f32 %v664, 1.0
    %v668 = vadd.f32 %v666, 1.0
    %v669 = vrcp.pop %v667
    %v670 = vmul.f32 1.0, %v669
    %v671 = vrcp.pop %v668
    %v672 = vmul.f32 1.0, %v671
    %v673 = vmul.f32 %v580, %v670
    %v674 = vmul.f32 %v581, %v672
    %675 = vst.msk [vmem:[#allocation16] sm:$0xff] %vm154, %v673
    %676 = vst.msk [vmem:[#allocation16 + $0x8] sm:$0xff] %vm154, %v674
    // Predicated region
    $region78: #{tpu_custom_call.1} parent=1 // pred_check
      _
    $region79: #{tpu_custom_call.1} parent=1 // pred_check_branch
      %678 = sbr.rel (0) target = $region81
    $region80: #{tpu_custom_call.1} parent=1 // pred_region
      %s680 = ssub.s32 256, 256
      %681 = vsyncadd [#allocation4], %s680
      %s682 = sshll.u32 [#allocation16], 4
      %s683 = int_to_ptr.vmem [resolvable:$true] %s682
      %688 = dma.vmem_to_hbm [thread:$0]  %s683, 256, %s11, [#allocation4], 128, 128, 8
    $region81: #{tpu_custom_call.1} parent=1 // pred_fallthru
      _
    // Predicated region
    $region82: #{tpu_custom_call.1} parent=1 // pred_check
      _
    $region83: #{tpu_custom_call.1} parent=1 // pred_check_branch
      %690 = sbr.rel (0) target = $region85
    $region84: #{tpu_custom_call.1} parent=1 // pred_region
      %691 = dma.done [#allocation4], 256
    $region85: #{tpu_custom_call.1} parent=1 // pred_fallthru
      _
    %692 = vsyncpa [#allocation3], 1
    %693 = vsyncpa [#allocation6], 1
    %694 = vsyncpa [#allocation9], 1
    %695 = vsyncpa [#allocation12], 1
    %696 = vsyncpa [#allocation15], 1
    %697 = vsyncpa [#allocation4], 1

</llo_original>
